<compile_context>
chip_gen: v7x
topology: tpu7x:2x2x1
jax: 0.10.0
libtpu: 0.0.40
codegen_flags: <defaults>
</compile_context>

<pallas_src>
import functools
import math

import jax
import jax.numpy as jnp
from jax.experimental import pallas as pl
from jax.experimental.pallas import tpu as pltpu


def _round_up(x, m):
    return (x + m - 1) // m * m


def _cdiv(a, b):
    return (a + b - 1) // b


# -----------------------------------------------------------------------------
# Kernels
# -----------------------------------------------------------------------------
def _noisy_linear_train_kernel(x_ref, eps_i_ref, eps_j_ref, mu_b_ref, sig_b_ref,
                               muw_ref, sigw_ref, y_ref, acc_ref, xe_ref,
                               *, tk, tn):
    """Grid = (N_tiles, K_tiles).  N is 'parallel', K (reduction) is last /
    'arbitrary'.  x, eps_i, eps_j, mu_b, sig_b are fully VMEM-resident; only
    the two weight streams are tiled/pipelined."""
    n = pl.program_id(0)
    k = pl.program_id(1)
    koff = pl.multiple_of(k * tk, tk)
    noff = pl.multiple_of(n * tn, tn)

    @pl.when(k == 0)
    def _():
        # Noisy input for the sigma path; computed once per N-tile group.
        xe_ref[...] = (x_ref[...].astype(jnp.float32)
                       * eps_i_ref[...]).astype(xe_ref.dtype)

    eps_j = eps_j_ref[:, pl.ds(noff, tn)]                       # [1, tn] f32
    x_k = x_ref[:, pl.ds(koff, tk)]                             # [B, tk]
    xe_k = xe_ref[:, pl.ds(koff, tk)]                           # [B, tk]

    # Two MXU matmuls with f32 accumulation; eps_j distributes over the K sum
    # so a single accumulator suffices.
    contrib = (jnp.dot(x_k, muw_ref[...], preferred_element_type=jnp.float32)
               + jnp.dot(xe_k, sigw_ref[...],
                         preferred_element_type=jnp.float32) * eps_j)

    @pl.when(k == 0)
    def _():
        acc_ref[...] = contrib

    @pl.when(k > 0)
    def _():
        acc_ref[...] += contrib

    @pl.when(k == pl.num_programs(1) - 1)
    def _():
        bias = mu_b_ref[:, pl.ds(noff, tn)] + sig_b_ref[:, pl.ds(noff, tn)] * eps_j
        y_ref[...] = (acc_ref[...] + bias).astype(y_ref.dtype)


def _noisy_linear_eval_kernel(x_ref, mu_b_ref, muw_ref, y_ref, acc_ref,
                              *, tk, tn):
    """Eval fast path: plain x @ mu_w + mu_b (sigma / noise never read)."""
    k = pl.program_id(1)
    koff = pl.multiple_of(k * tk, tk)
    noff = pl.multiple_of(pl.program_id(0) * tn, tn)

    contrib = jnp.dot(x_ref[:, pl.ds(koff, tk)], muw_ref[...],
                      preferred_element_type=jnp.float32)

    @pl.when(k == 0)
    def _():
        acc_ref[...] = contrib

    @pl.when(k > 0)
    def _():
        acc_ref[...] += contrib

    @pl.when(k == pl.num_programs(1) - 1)
    def _():
        y_ref[...] = (acc_ref[...] + mu_b_ref[:, pl.ds(noff, tn)]).astype(y_ref.dtype)


# -----------------------------------------------------------------------------
# Parameter preparation (hoisted out of the per-call forward path)
# -----------------------------------------------------------------------------
def prepare_noisy_linear_params(mu_w, sig_w, mu_b, sig_b, *,
                                param_dtype=jnp.bfloat16,
                                tn_max=512, tk_max=2048):
    """Lay the weights out once as zero-padded [K_pad, N_pad] blocks in the
    compute dtype (default bf16), so every forward call streams them straight
    into the MXU with no transpose / cast / pad fusions."""
    N, K = mu_w.shape
    K_pad = _round_up(K, 128)
    N_pad = _round_up(N, 128)

    # Tile derivation.  Keep >=2 tiles on the parallel N axis so both v7x
    # TensorCores get work (no-op on v5e/v6e, which have a single TC).
    tn = min(tn_max, N_pad)
    if N_pad > 128 and _cdiv(N_pad, tn) < 2:
        tn = _round_up(_cdiv(N_pad, 2), 128)
    tk = min(tk_max, K_pad)
    K_pad = _round_up(K_pad, tk)
    N_pad = _round_up(N_pad, tn)

    def pad_kn(w):
        out = jnp.zeros((K_pad, N_pad), param_dtype)
        return out.at[:K, :N].set(w.T.astype(param_dtype))

    def pad_row(v):
        out = jnp.zeros((1, N_pad), jnp.float32)
        return out.at[0, :N].set(v.astype(jnp.float32))

    return dict(
        num_in=K, num_out=N, K_pad=K_pad, N_pad=N_pad, tk=tk, tn=tn,
        dtype=param_dtype,
        mu_w_kn=pad_kn(mu_w), sig_w_kn=pad_kn(sig_w),
        mu_b=pad_row(mu_b), sig_b=pad_row(sig_b),
    )


# -----------------------------------------------------------------------------
# Forward wrapper
# -----------------------------------------------------------------------------
def factorized_noisy_linear(x, params, eps_i, eps_j, is_training=True):
    """x: [B, num_in] -> y: [B, num_out] (in x.dtype)."""
    B, K = x.shape
    assert K == params["num_in"]
    N = params["num_out"]
    K_pad, N_pad = params["K_pad"], params["N_pad"]
    tk, tn = params["tk"], params["tn"]
    dtype = params["dtype"]
    out_dtype = x.dtype

    itemsize = jnp.dtype(dtype).itemsize
    out_itemsize = jnp.dtype(out_dtype).itemsize
    sub = 16 if itemsize < 4 else 8          # sublane pack: 16 rows for bf16
    B_pad = _round_up(B, sub)

    xp = jnp.zeros((B_pad, K_pad), dtype).at[:B, :K].set(x.astype(dtype))
    # TODO(synk): add a tiled-x fallback kernel for extremely large B_pad*K_pad
    # that would not fit the per-core VMEM budget (v7x: 64 MiB/TC).

    grid = (N_pad // tn, K_pad // tk)

    # Resident blocks (constant index_map -> DMA'd once per core).
    x_spec = pl.BlockSpec((B_pad, K_pad), lambda n, k: (0, 0))
    row_k_spec = pl.BlockSpec((1, K_pad), lambda n, k: (0, 0))
    row_n_spec = pl.BlockSpec((1, N_pad), lambda n, k: (0, 0))
    # Streamed weight tiles.
    w_spec = pl.BlockSpec((tk, tn), lambda n, k: (k, n))
    y_spec = pl.BlockSpec((B_pad, tn), lambda n, k: (0, n))

    # VMEM budget estimate -> explicit scoped-VMEM limit.
    vmem_need = (3 * B_pad * K_pad * itemsize          # resident x (2 bufs) + xe
                 + 4 * tk * tn * itemsize              # 2 weight streams x 2 bufs
                 + B_pad * tn * 4                      # f32 accumulator
                 + 2 * B_pad * tn * out_itemsize       # output double buffer
                 + 4 * (K_pad + 3 * N_pad))            # small resident vectors
    vmem_limit = int(min(64 << 20, max(32 << 20, vmem_need + (4 << 20))))
    cparams = pltpu.CompilerParams(
        dimension_semantics=("parallel", "arbitrary"),
        vmem_limit_bytes=vmem_limit)

    if is_training:
        eps_i_row = jnp.zeros((1, K_pad), jnp.float32).at[0, :K].set(
            eps_i.astype(jnp.float32))
        eps_j_row = jnp.zeros((1, N_pad), jnp.float32).at[0, :N].set(
            eps_j.astype(jnp.float32))

        cost = pl.CostEstimate(
            flops=2 * 2 * B_pad * K_pad * N_pad,
            transcendentals=0,
            bytes_accessed=(itemsize * (2 * K_pad * N_pad + B_pad * K_pad)
                            + out_itemsize * B_pad * N_pad
                            + 4 * (K_pad + 3 * N_pad)),
        )
        kern = functools.partial(_noisy_linear_train_kernel, tk=tk, tn=tn)
        y_pad = pl.pallas_call(
            kern,
            out_shape=jax.ShapeDtypeStruct((B_pad, N_pad), out_dtype),
            grid_spec=pltpu.PrefetchScalarGridSpec(
                num_scalar_prefetch=0,
                grid=grid,
                in_specs=[x_spec, row_k_spec, row_n_spec, row_n_spec, row_n_spec,
                          w_spec, w_spec],
                out_specs=y_spec,
                scratch_shapes=[pltpu.VMEM((B_pad, tn), jnp.float32),
                                pltpu.VMEM((B_pad, K_pad), dtype)]),
            compiler_params=cparams,
            cost_estimate=cost,
        )(xp, eps_i_row, eps_j_row, params["mu_b"], params["sig_b"],
          params["mu_w_kn"], params["sig_w_kn"])
    else:
        cost = pl.CostEstimate(
            flops=2 * B_pad * K_pad * N_pad,
            transcendentals=0,
            bytes_accessed=(itemsize * (K_pad * N_pad + B_pad * K_pad)
                            + out_itemsize * B_pad * N_pad + 4 * N_pad),
        )
        kern = functools.partial(_noisy_linear_eval_kernel, tk=tk, tn=tn)
        y_pad = pl.pallas_call(
            kern,
            out_shape=jax.ShapeDtypeStruct((B_pad, N_pad), out_dtype),
            grid_spec=pltpu.PrefetchScalarGridSpec(
                num_scalar_prefetch=0,
                grid=grid,
                in_specs=[x_spec, row_n_spec, w_spec],
                out_specs=y_spec,
                scratch_shapes=[pltpu.VMEM((B_pad, tn), jnp.float32)]),
            compiler_params=cparams,
            cost_estimate=cost,
        )(xp, params["mu_b"], params["mu_w_kn"])

    return y_pad[:B, :N]


def _factorized_noise(key, n):
    """f(eps) = sign(eps) * sqrt(|eps|) for eps ~ N(0, 1)."""
    eps = jax.random.normal(key, (n,), dtype=jnp.float32)
    return jnp.sign(eps) * jnp.sqrt(jnp.abs(eps))


# -----------------------------------------------------------------------------
# Demo / correctness check
# -----------------------------------------------------------------------------
if __name__ == "__main__":
    num_in, num_out, batch = 32, 64, 8

    key = jax.random.PRNGKey(0)
    k_x, k_muw, k_mub, k_ei, k_ej = jax.random.split(key, 5)

    # Deterministic parameter initialization (matches reset_parameters()).
    std = 1.0 / math.sqrt(num_in)
    mu_w = jax.random.uniform(k_muw, (num_out, num_in), jnp.float32, -std, std)
    mu_b = jax.random.uniform(k_mub, (num_out,), jnp.float32, -std, std)
    sig_w = jnp.full((num_out, num_in), 0.5 / math.sqrt(num_in), jnp.float32)
    sig_b = jnp.full((num_out,), 0.5 / math.sqrt(num_in), jnp.float32)

    # Fresh factorized noise (forward() calls reset_noise() each step; drawn
    # here deterministically from the PRNG key).
    eps_i = _factorized_noise(k_ei, num_in)
    eps_j = _factorized_noise(k_ej, num_out)

    x = jax.random.normal(k_x, (batch, num_in), dtype=jnp.float32)

    # References.
    w_ref = mu_w + sig_w * jnp.outer(eps_j, eps_i)
    b_ref = mu_b + sig_b * eps_j
    y_ref_train = x @ w_ref.T + b_ref
    y_ref_eval = x @ mu_w.T + mu_b

    # --- f32 parameter layout: bit-for-bit-level check (tight tolerance) ---
    params_f32 = prepare_noisy_linear_params(mu_w, sig_w, mu_b, sig_b,
                                             param_dtype=jnp.float32)
    y = jax.block_until_ready(
        factorized_noisy_linear(x, params_f32, eps_i, eps_j, is_training=True))
    assert y.shape == (batch, num_out)
    assert jnp.allclose(y, y_ref_train, atol=1e-5, rtol=1e-5)

    y_e = jax.block_until_ready(
        factorized_noisy_linear(x, params_f32, eps_i, eps_j, is_training=False))
    assert jnp.allclose(y_e, y_ref_eval, atol=1e-5, rtol=1e-5)

    # --- default bf16 streaming path (perf path; loosened tolerance) ---
    params_bf16 = prepare_noisy_linear_params(mu_w, sig_w, mu_b, sig_b)
    y16 = jax.block_until_ready(
        factorized_noisy_linear(x, params_bf16, eps_i, eps_j, is_training=True))
    assert y16.shape == (batch, num_out)
    assert jnp.allclose(y16, y_ref_train, atol=5e-2, rtol=5e-2)

    y16_e = jax.block_until_ready(
        factorized_noisy_linear(x, params_bf16, eps_i, eps_j, is_training=False))
    assert jnp.allclose(y16_e, y_ref_eval, atol=5e-2, rtol=5e-2)

    print("KERNEL_OK")
</pallas_src>

<mosaic_0001>
module attributes {stable_mosaic.version = 11 : i64} {
  func.func @_noisy_linear_train_kernel(%arg0: i32, %arg1: i32, %arg2: memref<8x128xf32, #tpu.memory_space<vmem>>, %arg3: memref<1x128xf32, #tpu.memory_space<vmem>>, %arg4: memref<1x128xf32, #tpu.memory_space<vmem>>, %arg5: memref<1x128xf32, #tpu.memory_space<vmem>>, %arg6: memref<1x128xf32, #tpu.memory_space<vmem>>, %arg7: memref<128x128xf32, #tpu.memory_space<vmem>>, %arg8: memref<128x128xf32, #tpu.memory_space<vmem>>, %arg9: memref<8x128xf32, #tpu.memory_space<vmem>>, %arg10: memref<8x128xf32, #tpu.memory_space<vmem>>, %arg11: memref<8x128xf32, #tpu.memory_space<vmem>>) attributes {dimension_semantics = [#tpu.dimension_semantics<parallel>, #tpu.dimension_semantics<arbitrary>], iteration_bounds = array<i64: 1, 1>, scalar_prefetch = 0 : i64, scratch_operands = 2 : i64, tpu.core_type = #tpu.core_type<tc>, window_params = [{pipeline_mode = #tpu.pipeline_mode<synchronous>, transform_indices = @transform_0, window_bounds = array<i64: 8, 128>}, {pipeline_mode = #tpu.pipeline_mode<synchronous>, transform_indices = @transform_1, window_bounds = array<i64: 1, 128>}, {pipeline_mode = #tpu.pipeline_mode<synchronous>, transform_indices = @transform_2, window_bounds = array<i64: 1, 128>}, {pipeline_mode = #tpu.pipeline_mode<synchronous>, transform_indices = @transform_3, window_bounds = array<i64: 1, 128>}, {pipeline_mode = #tpu.pipeline_mode<synchronous>, transform_indices = @transform_4, window_bounds = array<i64: 1, 128>}, {transform_indices = @transform_5, window_bounds = array<i64: 128, 128>}, {transform_indices = @transform_6, window_bounds = array<i64: 128, 128>}, {transform_indices = @transform_7, window_bounds = array<i64: 8, 128>}]} {
    %c128_i32 = arith.constant 128 : i32
    %0 = arith.muli %arg1, %c128_i32 : i32
    %1 = tpu.assume_multiple %0, 128 : i32
    %c128_i32_0 = arith.constant 128 : i32
    %2 = arith.muli %arg0, %c128_i32_0 : i32
    %3 = tpu.assume_multiple %2, 128 : i32
    %c0_i32 = arith.constant 0 : i32
    %4 = arith.cmpi eq, %arg1, %c0_i32 : i32
    %5 = arith.extui %4 : i1 to i32
    %c0_i32_1 = arith.constant 0 : i32
    %6 = arith.cmpi ne, %5, %c0_i32_1 : i32
    scf.if %6 {
      %c0_15 = arith.constant 0 : index
      %c0_16 = arith.constant 0 : index
      %29 = vector.load %arg2[%c0_15, %c0_16] : memref<8x128xf32, #tpu.memory_space<vmem>>, vector<8x128xf32>
      %c0_17 = arith.constant 0 : index
      %c0_18 = arith.constant 0 : index
      %30 = vector.load %arg3[%c0_17, %c0_18] : memref<1x128xf32, #tpu.memory_space<vmem>>, vector<1x128xf32>
      %31 = vector.broadcast %30 : vector<1x128xf32> to vector<8x128xf32>
      %32 = arith.mulf %29, %31 : vector<8x128xf32>
      %c0_19 = arith.constant 0 : index
      %c0_20 = arith.constant 0 : index
      %33 = vector.load %arg11[%c0_19, %c0_20] : memref<8x128xf32, #tpu.memory_space<vmem>>, vector<8x128xf32>
      tpu.vector_store %arg11[%c0_19, %c0_20], %32 {strides = array<i32>} : memref<8x128xf32, #tpu.memory_space<vmem>>, vector<8x128xf32>,
    } else {
    }
    %c0 = arith.constant 0 : index
    %7 = arith.index_cast %3 : i32 to index
    %8 = vector.load %arg4[%c0, %7] : memref<1x128xf32, #tpu.memory_space<vmem>>, vector<1x128xf32>
    %c0_2 = arith.constant 0 : index
    %9 = arith.index_cast %1 : i32 to index
    %10 = vector.load %arg2[%c0_2, %9] : memref<8x128xf32, #tpu.memory_space<vmem>>, vector<8x128xf32>
    %c0_3 = arith.constant 0 : index
    %11 = arith.index_cast %1 : i32 to index
    %12 = vector.load %arg11[%c0_3, %11] : memref<8x128xf32, #tpu.memory_space<vmem>>, vector<8x128xf32>
    %c0_4 = arith.constant 0 : index
    %c0_5 = arith.constant 0 : index
    %13 = vector.load %arg7[%c0_4, %c0_5] : memref<128x128xf32, #tpu.memory_space<vmem>>, vector<128x128xf32>
    %cst = arith.constant dense<0.000000e+00> : vector<8x128xf32>
    %14 = tpu.matmul %10, %13, %cst {dimension_numbers = #tpu.dot_dimension_numbers<[1], [0], [0], [1], [0, 0, 1, 1], [], []>} : vector<8x128xf32>, vector<128x128xf32>, vector<8x128xf32> -> vector<8x128xf32>
    %c0_6 = arith.constant 0 : index
    %c0_7 = arith.constant 0 : index
    %15 = vector.load %arg8[%c0_6, %c0_7] : memref<128x128xf32, #tpu.memory_space<vmem>>, vector<128x128xf32>
    %cst_8 = arith.constant dense<0.000000e+00> : vector<8x128xf32>
    %16 = tpu.matmul %12, %15, %cst_8 {dimension_numbers = #tpu.dot_dimension_numbers<[1], [0], [0], [1], [0, 0, 1, 1], [], []>} : vector<8x128xf32>, vector<128x128xf32>, vector<8x128xf32> -> vector<8x128xf32>
    %17 = vector.broadcast %8 : vector<1x128xf32> to vector<8x128xf32>
    %18 = arith.mulf %16, %17 : vector<8x128xf32>
    %19 = arith.addf %14, %18 : vector<8x128xf32>
    %c0_i32_9 = arith.constant 0 : i32
    %20 = arith.cmpi eq, %arg1, %c0_i32_9 : i32
    %21 = arith.extui %20 : i1 to i32
    %c0_i32_10 = arith.constant 0 : i32
    %22 = arith.cmpi ne, %21, %c0_i32_10 : i32
    scf.if %22 {
      %c0_15 = arith.constant 0 : index
      %c0_16 = arith.constant 0 : index
      %29 = vector.load %arg10[%c0_15, %c0_16] : memref<8x128xf32, #tpu.memory_space<vmem>>, vector<8x128xf32>
      tpu.vector_store %arg10[%c0_15, %c0_16], %19 {strides = array<i32>} : memref<8x128xf32, #tpu.memory_space<vmem>>, vector<8x128xf32>,
    } else {
    }
    %c0_i32_11 = arith.constant 0 : i32
    %23 = arith.cmpi sgt, %arg1, %c0_i32_11 : i32
    %24 = arith.extui %23 : i1 to i32
    %c0_i32_12 = arith.constant 0 : i32
    %25 = arith.cmpi ne, %24, %c0_i32_12 : i32
    scf.if %25 {
      %c0_15 = arith.constant 0 : index
      %c0_16 = arith.constant 0 : index
      %29 = vector.load %arg10[%c0_15, %c0_16] : memref<8x128xf32, #tpu.memory_space<vmem>>, vector<8x128xf32>
      %30 = arith.addf %29, %19 : vector<8x128xf32>
      %c0_17 = arith.constant 0 : index
      %c0_18 = arith.constant 0 : index
      %31 = vector.load %arg10[%c0_17, %c0_18] : memref<8x128xf32, #tpu.memory_space<vmem>>, vector<8x128xf32>
      tpu.vector_store %arg10[%c0_17, %c0_18], %30 {strides = array<i32>} : memref<8x128xf32, #tpu.memory_space<vmem>>, vector<8x128xf32>,
    } else {
    }
    %c0_i32_13 = arith.constant 0 : i32
    %26 = arith.cmpi eq, %arg1, %c0_i32_13 : i32
    %27 = arith.extui %26 : i1 to i32
    %c0_i32_14 = arith.constant 0 : i32
    %28 = arith.cmpi ne, %27, %c0_i32_14 : i32
    scf.if %28 {
      %c0_15 = arith.constant 0 : index
      %29 = arith.index_cast %3 : i32 to index
      %30 = vector.load %arg5[%c0_15, %29] : memref<1x128xf32, #tpu.memory_space<vmem>>, vector<1x128xf32>
      %c0_16 = arith.constant 0 : index
      %31 = arith.index_cast %3 : i32 to index
      %32 = vector.load %arg6[%c0_16, %31] : memref<1x128xf32, #tpu.memory_space<vmem>>, vector<1x128xf32>
      %33 = arith.mulf %32, %8 : vector<1x128xf32>
      %34 = arith.addf %30, %33 : vector<1x128xf32>
      %c0_17 = arith.constant 0 : index
      %c0_18 = arith.constant 0 : index
      %35 = vector.load %arg10[%c0_17, %c0_18] : memref<8x128xf32, #tpu.memory_space<vmem>>, vector<8x128xf32>
      %36 = vector.broadcast %34 : vector<1x128xf32> to vector<8x128xf32>
      %37 = arith.addf %35, %36 : vector<8x128xf32>
      %c0_19 = arith.constant 0 : index
      %c0_20 = arith.constant 0 : index
      %38 = vector.load %arg9[%c0_19, %c0_20] : memref<8x128xf32, #tpu.memory_space<vmem>>, vector<8x128xf32>
      tpu.vector_store %arg9[%c0_19, %c0_20], %37 {strides = array<i32>} : memref<8x128xf32, #tpu.memory_space<vmem>>, vector<8x128xf32>,
    } else {
    }
    return
  }
  func.func @transform_0(%arg0: i32, %arg1: i32) -> (i32, i32) {
    %c0_i32 = arith.constant 0 : i32
    %c0_i32_0 = arith.constant 0 : i32
    %c0_i32_1 = arith.constant 0 : i32
    return %c0_i32, %c0_i32_0 : i32, i32
  }
  func.func @transform_1(%arg0: i32, %arg1: i32) -> (i32, i32) {
    %c0_i32 = arith.constant 0 : i32
    %c0_i32_0 = arith.constant 0 : i32
    %c0_i32_1 = arith.constant 0 : i32
    return %c0_i32, %c0_i32_0 : i32, i32
  }
  func.func @transform_2(%arg0: i32, %arg1: i32) -> (i32, i32) {
    %c0_i32 = arith.constant 0 : i32
    %c0_i32_0 = arith.constant 0 : i32
    %c0_i32_1 = arith.constant 0 : i32
    return %c0_i32, %c0_i32_0 : i32, i32
  }
  func.func @transform_3(%arg0: i32, %arg1: i32) -> (i32, i32) {
    %c0_i32 = arith.constant 0 : i32
    %c0_i32_0 = arith.constant 0 : i32
    %c0_i32_1 = arith.constant 0 : i32
    return %c0_i32, %c0_i32_0 : i32, i32
  }
  func.func @transform_4(%arg0: i32, %arg1: i32) -> (i32, i32) {
    %c0_i32 = arith.constant 0 : i32
    %c0_i32_0 = arith.constant 0 : i32
    %c0_i32_1 = arith.constant 0 : i32
    return %c0_i32, %c0_i32_0 : i32, i32
  }
  func.func @transform_5(%arg0: i32, %arg1: i32) -> (i32, i32) {
    %c0_i32 = arith.constant 0 : i32
    return %arg1, %arg0 : i32, i32
  }
  func.func @transform_6(%arg0: i32, %arg1: i32) -> (i32, i32) {
    %c0_i32 = arith.constant 0 : i32
    return %arg1, %arg0 : i32, i32
  }
  func.func @transform_7(%arg0: i32, %arg1: i32) -> (i32, i32) {
    %c0_i32 = arith.constant 0 : i32
    %c0_i32_0 = arith.constant 0 : i32
    return %c0_i32, %arg0 : i32, i32
  }
}

</mosaic_0001>

<llo_original>
// kernel: tpu_custom_call.1
$region0: #{tpu_custom_call.1}
  #allocation0 [shape = 'u32[]', space=smem, size = 0x4, offset = 0x4, fixed_abs, tag = 'smem constant byte address 0x4 - core index']
  #allocation1 [shape = 'u32[144,128]{1,0:T(1,128)}', space=vmem, size = 0x12000, scoped, tag = 'internal scratch']
  #allocation2 [shape = 'f32[8,128]{1,0:T(8,128)}', space=vmem, size = 0x1000, scoped, tag = 'scratch operand']
  #allocation3 [shape = 'f32[8,128]{1,0:T(8,128)}', space=vmem, size = 0x1000, scoped, tag = 'scratch operand']
  %s0 = inlined_call_operand.hbm [shape: f32[8,128], index: 0, kind: input, shape index: {}]
  %s1 = inlined_call_operand.vmem [shape: f32[1,128], index: 1, kind: input, shape index: {}]
  %s2 = inlined_call_operand.vmem [shape: f32[1,128], index: 2, kind: input, shape index: {}]
  %s3 = inlined_call_operand.vmem [shape: f32[1,128], index: 3, kind: input, shape index: {}]
  %s4 = inlined_call_operand.vmem [shape: f32[1,128], index: 4, kind: input, shape index: {}]
  %s5 = inlined_call_operand.hbm [shape: f32[128,128], index: 5, kind: input, shape index: {}]
  %s6 = inlined_call_operand.hbm [shape: f32[128,128], index: 6, kind: input, shape index: {}]
  %s7 = inlined_call_operand.hbm [shape: f32[8,128], index: 7, kind: output, shape index: {}]
  %s8 = sld [smem:[#allocation0]]
  $region66: #{tpu_custom_call.1} parent=0
    _
  %s10 = ssub.s32 1, %s8
  %s11 = scalar_select 0, %s10, %s8
  $region1: #{tpu_custom_call.1} parent=0
    #allocation4 [shape = 'u8[4096]{0}', space=vmem, size = 0x1000, scoped, tag = 'input window, operand 0, single buffered']
    #allocation5 [shape = 's32[1]{0}', space=sflag, size = 0x4, scoped, tag = 'scoped memory for tpu_custom_call.1']
    #allocation6 [shape = 's32[1]{0}', space=sflag, size = 0x4, scoped, tag = 'scoped memory for tpu_custom_call.1']
    #allocation7 [shape = 'u8[65536]{0}', space=vmem, size = 0x10000, scoped, tag = 'input window, operand 5, single buffered']
    #allocation8 [shape = 's32[1]{0}', space=sflag, size = 0x4, scoped, tag = 'scoped memory for tpu_custom_call.1']
    #allocation9 [shape = 'u8[65536]{0}', space=vmem, size = 0x10000, scoped, tag = 'input window, operand 6, single buffered']
    #allocation10 [shape = 'u8[4096]{0}', space=vmem, size = 0x1000, scoped, tag = 'output window, operand 0, single buffered']
    %12 = vsyncpa [#allocation5], 0
    %13 = vsyncpa [#allocation8], 0
    %14 = vsyncpa [#allocation6], 0
    // Predicated region
    $region2: #{tpu_custom_call.1} parent=1 // pred_check
      _
    $region3: #{tpu_custom_call.1} parent=1 // pred_check_branch
      %16 = sbr.rel (0) target = $region5
    $region4: #{tpu_custom_call.1} parent=1 // pred_region
      %s18 = ssub.s32 128, 128
      %19 = vsyncadd [#allocation5], %s18
      %s21 = sshll.u32 [#allocation4], 4
      %s22 = int_to_ptr.vmem [resolvable:$true] %s21
      %24 = dma.hbm_to_vmem [thread:$0]  %s0, 128, %s22, [#allocation5]
    $region5: #{tpu_custom_call.1} parent=1 // pred_fallthru
      _
    // Predicated region
    $region6: #{tpu_custom_call.1} parent=1 // pred_check
      _
    $region7: #{tpu_custom_call.1} parent=1 // pred_check_branch
      %26 = sbr.rel (0) target = $region9
    $region8: #{tpu_custom_call.1} parent=1 // pred_region
      _
    $region9: #{tpu_custom_call.1} parent=1 // pred_fallthru
      _
    // Predicated region
    $region10: #{tpu_custom_call.1} parent=1 // pred_check
      _
    $region11: #{tpu_custom_call.1} parent=1 // pred_check_branch
      %28 = sbr.rel (0) target = $region13
    $region12: #{tpu_custom_call.1} parent=1 // pred_region
      _
    $region13: #{tpu_custom_call.1} parent=1 // pred_fallthru
      _
    // Predicated region
    $region14: #{tpu_custom_call.1} parent=1 // pred_check
      _
    $region15: #{tpu_custom_call.1} parent=1 // pred_check_branch
      %30 = sbr.rel (0) target = $region17
    $region16: #{tpu_custom_call.1} parent=1 // pred_region
      _
    $region17: #{tpu_custom_call.1} parent=1 // pred_fallthru
      _
    // Predicated region
    $region18: #{tpu_custom_call.1} parent=1 // pred_check
      _
    $region19: #{tpu_custom_call.1} parent=1 // pred_check_branch
      %32 = sbr.rel (0) target = $region21
    $region20: #{tpu_custom_call.1} parent=1 // pred_region
      _
    $region21: #{tpu_custom_call.1} parent=1 // pred_fallthru
      _
    // Predicated region
    $region22: #{tpu_custom_call.1} parent=1 // pred_check
      _
    $region23: #{tpu_custom_call.1} parent=1 // pred_check_branch
      %34 = sbr.rel (0) target = $region25
    $region24: #{tpu_custom_call.1} parent=1 // pred_region
      %s36 = ssub.s32 2048, 2048
      %37 = vsyncadd [#allocation8], %s36
      %s38 = sshll.u32 [#allocation7], 4
      %s39 = int_to_ptr.vmem [resolvable:$true] %s38
      %44 = dma.hbm_to_vmem [thread:$0]  %s5, 2048, %s39, [#allocation8], 128, 128, 8
    $region25: #{tpu_custom_call.1} parent=1 // pred_fallthru
      _
    // Predicated region
    $region26: #{tpu_custom_call.1} parent=1 // pred_check
      _
    $region27: #{tpu_custom_call.1} parent=1 // pred_check_branch
      %46 = sbr.rel (0) target = $region29
    $region28: #{tpu_custom_call.1} parent=1 // pred_region
      %s48 = ssub.s32 2048, 2048
      %49 = vsyncadd [#allocation8], %s48
      %s50 = sshll.u32 [#allocation9], 4
      %s51 = int_to_ptr.vmem [resolvable:$true] %s50
      %56 = dma.hbm_to_vmem [thread:$0]  %s6, 2048, %s51, [#allocation8], 128, 128, 8
    $region29: #{tpu_custom_call.1} parent=1 // pred_fallthru
      _
    // Predicated region
    $region30: #{tpu_custom_call.1} parent=1 // pred_check
      _
    $region31: #{tpu_custom_call.1} parent=1 // pred_check_branch
      %58 = sbr.rel (0) target = $region33
    $region32: #{tpu_custom_call.1} parent=1 // pred_region
      %59 = dma.done [#allocation5], 128
    $region33: #{tpu_custom_call.1} parent=1 // pred_fallthru
      _
    // Predicated region
    $region34: #{tpu_custom_call.1} parent=1 // pred_check
      _
    $region35: #{tpu_custom_call.1} parent=1 // pred_check_branch
      %61 = sbr.rel (0) target = $region37
    $region36: #{tpu_custom_call.1} parent=1 // pred_region
      %62 = dma.done [#allocation8], 2048
    $region37: #{tpu_custom_call.1} parent=1 // pred_fallthru
      _
    // Predicated region
    $region38: #{tpu_custom_call.1} parent=1 // pred_check
      _
    $region39: #{tpu_custom_call.1} parent=1 // pred_check_branch
      %64 = sbr.rel (0) target = $region41
    $region40: #{tpu_custom_call.1} parent=1 // pred_region
      %65 = dma.done [#allocation8], 2048
    $region41: #{tpu_custom_call.1} parent=1 // pred_fallthru
      _
    %s66 = smul.u32 0, 128
    %s67 = smul.u32 0, 128
    %p68 = scmp.eq.s32.totalorder 0, 0
    // Predicated region
    $region42: #{tpu_custom_call.1} parent=1 // pred_check
      %p69 = pneg %p68
    $region43: #{tpu_custom_call.1} parent=1 // pred_check_branch
      %71 = sbr.rel (%p69) target = $region45
    $region44: #{tpu_custom_call.1} parent=1 // pred_region
      %v72 = vld [vmem:[#allocation4] sm:$0xff]
      %v73 = vld [vmem:[%s1] sm:$0x1]
      %v75 = vlaneseq
      %v76 = vshrl.u32 %v75, 7
      %v77 = vsub.s32 0, %v76
      %v78 = vrot.slane %v73, %v77
      %v80 = vmul.f32 %v72, %v78
      %81 = vst [vmem:[#allocation3] sm:$0xff] %v80
    $region45: #{tpu_custom_call.1} parent=1 // pred_fallthru
      _
    %s82 = sshra.s32 %s67, 7
    %s83 = sand.u32 %s67, 127
    %s84 = scalar_lea.vmem %s2, %s82
    %v85 = vld [vmem:[%s84] sm:$0x1]
    %s86 = sshra.s32 %s66, 7
    %s87 = sand.u32 %s66, 127
    %s88 = scalar_lea.vmem [#allocation4], %s86
    %v89 = vld [vmem:[%s88] sm:$0xff]
    %s90 = scalar_lea.vmem [#allocation3], %s86
    %v91 = vld [vmem:[%s90] sm:$0xff]
    %v92 = vld [vmem:[#allocation7] sm:$0xff]
    %v93 = vld [vmem:[#allocation7 + $0x8] sm:$0xff]
    %v94 = vld [vmem:[#allocation7 + $0x10] sm:$0xff]
    %v95 = vld [vmem:[#allocation7 + $0x18] sm:$0xff]
    %v96 = vld [vmem:[#allocation7 + $0x20] sm:$0xff]
    %v97 = vld [vmem:[#allocation7 + $0x28] sm:$0xff]
    %v98 = vld [vmem:[#allocation7 + $0x30] sm:$0xff]
    %v99 = vld [vmem:[#allocation7 + $0x38] sm:$0xff]
    %v100 = vld [vmem:[#allocation7 + $0x40] sm:$0xff]
    %v101 = vld [vmem:[#allocation7 + $0x48] sm:$0xff]
    %v102 = vld [vmem:[#allocation7 + $0x50] sm:$0xff]
    %v103 = vld [vmem:[#allocation7 + $0x58] sm:$0xff]
    %v104 = vld [vmem:[#allocation7 + $0x60] sm:$0xff]
    %v105 = vld [vmem:[#allocation7 + $0x68] sm:$0xff]
    %v106 = vld [vmem:[#allocation7 + $0x70] sm:$0xff]
    %v107 = vld [vmem:[#allocation7 + $0x78] sm:$0xff]
    %v108 = vld [vmem:[#allocation9] sm:$0xff]
    %v109 = vld [vmem:[#allocation9 + $0x8] sm:$0xff]
    %v110 = vld [vmem:[#allocation9 + $0x10] sm:$0xff]
    %v111 = vld [vmem:[#allocation9 + $0x18] sm:$0xff]
    %v112 = vld [vmem:[#allocation9 + $0x20] sm:$0xff]
    %v113 = vld [vmem:[#allocation9 + $0x28] sm:$0xff]
    %v114 = vld [vmem:[#allocation9 + $0x30] sm:$0xff]
    %v115 = vld [vmem:[#allocation9 + $0x38] sm:$0xff]
    %v116 = vld [vmem:[#allocation9 + $0x40] sm:$0xff]
    %v117 = vld [vmem:[#allocation9 + $0x48] sm:$0xff]
    %v118 = vld [vmem:[#allocation9 + $0x50] sm:$0xff]
    %v119 = vld [vmem:[#allocation9 + $0x58] sm:$0xff]
    %v120 = vld [vmem:[#allocation9 + $0x60] sm:$0xff]
    %v121 = vld [vmem:[#allocation9 + $0x68] sm:$0xff]
    %v122 = vld [vmem:[#allocation9 + $0x70] sm:$0xff]
    %v123 = vld [vmem:[#allocation9 + $0x78] sm:$0xff]
    %124 = vmatprep.subr.mxu0 0.0
    %125 = vmatpush1.msra.mxu0 %v108
    %126 = vmatprep.subr.mxu0 0.0
    %127 = vmatpush1.msra.mxu0 %v109
    %128 = vmatprep.subr.mxu0 0.0
    %129 = vmatpush1.msra.mxu0 %v110
    %130 = vmatprep.subr.mxu0 0.0
    %131 = vmatpush1.msra.mxu0 %v111
    %132 = vmatprep.subr.mxu0 0.0
    %133 = vmatpush1.msra.mxu0 %v112
    %134 = vmatprep.subr.mxu0 0.0
    %135 = vmatpush1.msra.mxu0 %v113
    %136 = vmatprep.subr.mxu0 0.0
    %137 = vmatpush1.msra.mxu0 %v114
    %138 = vmatprep.subr.mxu0 0.0
    %139 = vmatpush1.msra.mxu0 %v115
    %140 = vmatprep.subr.mxu0 0.0
    %141 = vmatpush1.msra.mxu0 %v116
    %142 = vmatprep.subr.mxu0 0.0
    %143 = vmatpush1.msra.mxu0 %v117
    %144 = vmatprep.subr.mxu0 0.0
    %145 = vmatpush1.msra.mxu0 %v118
    %146 = vmatprep.subr.mxu0 0.0
    %147 = vmatpush1.msra.mxu0 %v119
    %148 = vmatprep.subr.mxu0 0.0
    %149 = vmatpush1.msra.mxu0 %v120
    %150 = vmatprep.subr.mxu0 0.0
    %151 = vmatpush1.msra.mxu0 %v121
    %152 = vmatprep.subr.mxu0 0.0
    %153 = vmatpush1.msra.mxu0 %v122
    %154 = vmatprep.subr.mxu0 0.0
    %155 = vmatpush1.msra.mxu0 %v123
    %156 = vmatprep.subr.mxu0 0.0
    %157 = vmatpush1.msra.mxu0 0.0
    %158 = vmatprep.subr.mxu0 0.0
    %159 = vmatpush1.msra.mxu0 0.0
    %160 = vmatprep.subr.mxu0 0.0
    %161 = vmatpush1.msra.mxu0 0.0
    %162 = vmatprep.subr.mxu0 0.0
    %163 = vmatpush1.msra.mxu0 0.0
    %164 = vmatprep.subr.mxu0 0.0
    %165 = vmatpush1.msra.mxu0 0.0
    %166 = vmatprep.subr.mxu0 0.0
    %167 = vmatpush1.msra.mxu0 0.0
    %168 = vmatprep.subr.mxu0 0.0
    %169 = vmatpush1.msra.mxu0 0.0
    %170 = vmatprep.subr.mxu0 0.0
    %171 = vmatpush1.msra.mxu0 0.0
    %172 = vmatprep.subr.mxu0 0.0
    %173 = vmatpush1.msra.mxu0 0.0
    %174 = vmatprep.subr.mxu0 0.0
    %175 = vmatpush1.msra.mxu0 0.0
    %176 = vmatprep.subr.mxu0 0.0
    %177 = vmatpush1.msra.mxu0 0.0
    %178 = vmatprep.subr.mxu0 0.0
    %179 = vmatpush1.msra.mxu0 0.0
    %180 = vmatprep.subr.mxu0 0.0
    %181 = vmatpush1.msra.mxu0 0.0
    %182 = vmatprep.subr.mxu0 0.0
    %183 = vmatpush1.msra.mxu0 0.0
    %184 = vmatprep.subr.mxu0 0.0
    %185 = vmatpush1.msra.mxu0 0.0
    %186 = vmatprep.subr.mxu0 0.0
    %187 = vmatpush1.msra.mxu0 0.0
    %188 = vmatprep.mubr.f32.mxu0 0.0
    %189 = vmatmul.mubr.f32.gmra.mrb[0].mxu0 %v91
    %v190 = vpop.f32.mrb[0].mxu0
    %v191 = vadd.f32 0.0, %v190
    %v192 = vpop.f32.mrb[0].mxu0
    %193 = vdwg.mxu0
    %v195 = vlaneseq
    %v196 = vshrl.u32 %v195, 7
    %v197 = vsub.s32 0, %v196
    %v198 = vrot.slane %v85, %v197
    %v200 = vmul.f32 %v191, %v198
    %201 = vmatprep.subr.mxu0 0.0
    %202 = vmatpush1.msra.mxu0 %v92
    %203 = vmatprep.subr.mxu0 0.0
    %204 = vmatpush1.msra.mxu0 %v93
    %205 = vmatprep.subr.mxu0 0.0
    %206 = vmatpush1.msra.mxu0 %v94
    %207 = vmatprep.subr.mxu0 0.0
    %208 = vmatpush1.msra.mxu0 %v95
    %209 = vmatprep.subr.mxu0 0.0
    %210 = vmatpush1.msra.mxu0 %v96
    %211 = vmatprep.subr.mxu0 0.0
    %212 = vmatpush1.msra.mxu0 %v97
    %213 = vmatprep.subr.mxu0 0.0
    %214 = vmatpush1.msra.mxu0 %v98
    %215 = vmatprep.subr.mxu0 0.0
    %216 = vmatpush1.msra.mxu0 %v99
    %217 = vmatprep.subr.mxu0 0.0
    %218 = vmatpush1.msra.mxu0 %v100
    %219 = vmatprep.subr.mxu0 0.0
    %220 = vmatpush1.msra.mxu0 %v101
    %221 = vmatprep.subr.mxu0 0.0
    %222 = vmatpush1.msra.mxu0 %v102
    %223 = vmatprep.subr.mxu0 0.0
    %224 = vmatpush1.msra.mxu0 %v103
    %225 = vmatprep.subr.mxu0 0.0
    %226 = vmatpush1.msra.mxu0 %v104
    %227 = vmatprep.subr.mxu0 0.0
    %228 = vmatpush1.msra.mxu0 %v105
    %229 = vmatprep.subr.mxu0 0.0
    %230 = vmatpush1.msra.mxu0 %v106
    %231 = vmatprep.subr.mxu0 0.0
    %232 = vmatpush1.msra.mxu0 %v107
    %233 = vmatprep.subr.mxu0 0.0
    %234 = vmatpush1.msra.mxu0 0.0
    %235 = vmatprep.subr.mxu0 0.0
    %236 = vmatpush1.msra.mxu0 0.0
    %237 = vmatprep.subr.mxu0 0.0
    %238 = vmatpush1.msra.mxu0 0.0
    %239 = vmatprep.subr.mxu0 0.0
    %240 = vmatpush1.msra.mxu0 0.0
    %241 = vmatprep.subr.mxu0 0.0
    %242 = vmatpush1.msra.mxu0 0.0
    %243 = vmatprep.subr.mxu0 0.0
    %244 = vmatpush1.msra.mxu0 0.0
    %245 = vmatprep.subr.mxu0 0.0
    %246 = vmatpush1.msra.mxu0 0.0
    %247 = vmatprep.subr.mxu0 0.0
    %248 = vmatpush1.msra.mxu0 0.0
    %249 = vmatprep.subr.mxu0 0.0
    %250 = vmatpush1.msra.mxu0 0.0
    %251 = vmatprep.subr.mxu0 0.0
    %252 = vmatpush1.msra.mxu0 0.0
    %253 = vmatprep.subr.mxu0 0.0
    %254 = vmatpush1.msra.mxu0 0.0
    %255 = vmatprep.subr.mxu0 0.0
    %256 = vmatpush1.msra.mxu0 0.0
    %257 = vmatprep.subr.mxu0 0.0
    %258 = vmatpush1.msra.mxu0 0.0
    %259 = vmatprep.subr.mxu0 0.0
    %260 = vmatpush1.msra.mxu0 0.0
    %261 = vmatprep.subr.mxu0 0.0
    %262 = vmatpush1.msra.mxu0 0.0
    %263 = vmatprep.subr.mxu0 0.0
    %264 = vmatpush1.msra.mxu0 0.0
    %265 = vmatprep.mubr.f32.mxu0 0.0
    %266 = vmatmul.mubr.f32.gmra.mrb[0].mxu0 %v89
    %v267 = vpop.f32.mrb[0].mxu0
    %v268 = vadd.f32 %v200, %v267
    %v269 = vpop.f32.mrb[0].mxu0
    %270 = vdwg.mxu0
    // Predicated region
    $region46: #{tpu_custom_call.1} parent=1 // pred_check
      %p271 = pneg %p68
    $region47: #{tpu_custom_call.1} parent=1 // pred_check_branch
      %273 = sbr.rel (%p271) target = $region49
    $region48: #{tpu_custom_call.1} parent=1 // pred_region
      %274 = vst [vmem:[#allocation2] sm:$0xff] %v268
    $region49: #{tpu_custom_call.1} parent=1 // pred_fallthru
      _
    %p275 = scmp.gt.s32.totalorder 0, 0
    // Predicated region
    $region50: #{tpu_custom_call.1} parent=1 // pred_check
      %p276 = pneg %p275
    $region51: #{tpu_custom_call.1} parent=1 // pred_check_branch
      %278 = sbr.rel (%p276) target = $region53
    $region52: #{tpu_custom_call.1} parent=1 // pred_region
      %v279 = vld [vmem:[#allocation2] sm:$0xff]
      %v280 = vadd.f32 %v279, %v268
      %281 = vst [vmem:[#allocation2] sm:$0xff] %v280
    $region53: #{tpu_custom_call.1} parent=1 // pred_fallthru
      _
    // Predicated region
    $region54: #{tpu_custom_call.1} parent=1 // pred_check
      %p282 = pneg %p68
    $region55: #{tpu_custom_call.1} parent=1 // pred_check_branch
      %284 = sbr.rel (%p282) target = $region57
    $region56: #{tpu_custom_call.1} parent=1 // pred_region
      %s285 = scalar_lea.vmem %s3, %s82
      %v286 = vld [vmem:[%s285] sm:$0x1]
      %s287 = scalar_lea.vmem %s4, %s82
      %v288 = vld [vmem:[%s287] sm:$0x1]
      %v289 = vmul.f32 %v288, %v85
      %v290 = vadd.f32 %v286, %v289
      %v291 = vld [vmem:[#allocation2] sm:$0xff]
      %v293 = vlaneseq
      %v294 = vshrl.u32 %v293, 7
      %v295 = vsub.s32 0, %v294
      %v296 = vrot.slane %v290, %v295
      %v298 = vadd.f32 %v291, %v296
      %299 = vst [vmem:[#allocation10] sm:$0xff] %v298
    $region57: #{tpu_custom_call.1} parent=1 // pred_fallthru
      _
    // Predicated region
    $region58: #{tpu_custom_call.1} parent=1 // pred_check
      _
    $region59: #{tpu_custom_call.1} parent=1 // pred_check_branch
      %301 = sbr.rel (0) target = $region61
    $region60: #{tpu_custom_call.1} parent=1 // pred_region
      %s303 = ssub.s32 128, 128
      %304 = vsyncadd [#allocation6], %s303
      %s306 = sshll.u32 [#allocation10], 4
      %s307 = int_to_ptr.vmem [resolvable:$true] %s306
      %309 = dma.vmem_to_hbm [thread:$0]  %s307, 128, %s7, [#allocation6]
    $region61: #{tpu_custom_call.1} parent=1 // pred_fallthru
      _
    // Predicated region
    $region62: #{tpu_custom_call.1} parent=1 // pred_check
      _
    $region63: #{tpu_custom_call.1} parent=1 // pred_check_branch
      %311 = sbr.rel (0) target = $region65
    $region64: #{tpu_custom_call.1} parent=1 // pred_region
      %312 = dma.done [#allocation6], 128
    $region65: #{tpu_custom_call.1} parent=1 // pred_fallthru
      _
    %313 = vsyncpa [#allocation5], 1
    %314 = vsyncpa [#allocation8], 1
    %315 = vsyncpa [#allocation6], 1

</llo_original>
